<compile_context>
chip_gen: v7x
topology: tpu7x:2x2x1
jax: 0.10.0
libtpu: 0.0.40
codegen_flags: <defaults>
</compile_context>

<pallas_src>
import jax
import jax.numpy as jnp
from jax import lax
from jax.experimental import pallas as pl
from jax.experimental.pallas import tpu as pltpu


# --------------------------------------------------------------------------
# Kernels
# --------------------------------------------------------------------------

def _fg_kernel(t_ref, fg_ref, gts_ref):
    """Target scores tile (C, T) -> fg[c, n] = (argmax_c t[:, n] == c).

    Also accumulates gts[c] = sum_n fg[c, n] into a resident (C, 1) output so
    the fg array is never re-read from HBM just for the class totals.
    """
    i = pl.program_id(0)

    @pl.when(i == 0)
    def _():
        gts_ref[...] = jnp.zeros_like(gts_ref)

    t = t_ref[...]
    c, n = t.shape
    c_iota = lax.broadcasted_iota(jnp.int32, (c, n), 0)
    # first-occurrence argmax over the class (sublane) axis == torch.argmax(target, 1)
    m = jnp.max(t, axis=0, keepdims=True)                                   # (1, T)
    label = jnp.min(jnp.where(t == m, c_iota, c), axis=0, keepdims=True)    # (1, T)
    fg = (c_iota == label).astype(jnp.float32)                              # (C, T)
    fg_ref[...] = fg.astype(fg_ref.dtype)                                   # bf16 out
    gts_ref[...] += jnp.sum(fg, axis=1, keepdims=True)                      # (C, 1)


def _lovasz_kernel(nes_ref, fg_ref, gts_ref, out_ref, prefix_ref, prev_jac_ref):
    """Per-class dot(errors_sorted, lovasz_grad(fg_sorted)), tiled over pixels.

    Grid = (heads, N // T).  Head axis is "parallel" (both TCs on v7x), pixel
    axis is "arbitrary" and carries running state in scratch.

    nes_ref      : (C, T) tile of the *negated* sorted errors (the sort key).
    fg_ref       : (C, T) tile of fg permuted by the same sort (bf16 payload).
    gts_ref      : (C, 1) total foreground count per class.
    out_ref      : (C, 1) per-class loss accumulator for the current head.
    prefix_ref   : (C, 1) running cumsum(fg) carried across tiles.
    prev_jac_ref : (C, 1) last jaccard value of the previous tile.
    """
    i = pl.program_id(1)
    c, t = nes_ref.shape

    @pl.when(i == 0)
    def _():
        out_ref[...] = jnp.zeros_like(out_ref)
        prefix_ref[...] = jnp.zeros_like(prefix_ref)
        prev_jac_ref[...] = jnp.zeros_like(prev_jac_ref)

    es = -nes_ref[...]                                   # recover errors (free negate)
    fg = fg_ref[...].astype(jnp.float32)                 # exact 0/1
    gts = gts_ref[...]                                   # (C, 1)

    lane = lax.broadcasted_iota(jnp.int32, (c, t), 1)    # (C, T)

    # Inclusive prefix sum of fg along the lane axis (Hillis-Steele shift-add
    # scan, log2(T) roll/where/add steps — XLU + VPU only, no MXU).
    cs = fg
    d = 1
    while d < t:
        cs = cs + jnp.where(lane >= d, pltpu.roll(cs, d, 1), 0.0)
        d *= 2

    cs_fg = prefix_ref[...] + cs                         # global cumsum(fg)
    pos = (i * t + lane + 1).astype(jnp.float32)         # global 1-based index
    intersection = gts - cs_fg
    union = gts + (pos - cs_fg)                          # = gts + cumsum(1-fg) >= 1
    jaccard = 1.0 - intersection / union                 # (C, T)

    # First difference jaccard[1:] -= jaccard[:-1]; previous tile's last value
    # is carried in scratch (0 for the very first element -> grad[0]=jaccard[0]).
    shifted = pltpu.roll(jaccard, 1, 1)
    shifted = jnp.where(lane == 0, prev_jac_ref[...], shifted)
    out_ref[...] += jnp.sum(es * (jaccard - shifted), axis=1, keepdims=True)

    prefix_ref[...] = cs_fg[:, t - 1:t]
    prev_jac_ref[...] = jaccard[:, t - 1:t]


# --------------------------------------------------------------------------
# Wrappers
# --------------------------------------------------------------------------

def _flatten_nchw_to_cn(x):
    """NCHW -> (C, N), N = B*H*W; column n matches flatten_probas row n."""
    b, c, h, w = x.shape
    return jnp.transpose(x, (1, 0, 2, 3)).reshape(c, -1)


def _pick_tile(n, cap):
    """Largest multiple of 128 that divides n and is <= cap."""
    t = min(cap, n)
    t -= t % 128
    while t >= 128:
        if n % t == 0:
            return t
        t -= 128
    # TODO(synk): N not a multiple of 128 -> single full-N block; for huge,
    # 128-indivisible inputs this should pad+mask instead (VMEM guard).
    return n


def _compute_fg_and_gts(target_cn):
    """fg (C, N) bf16 one-hot of argmax(target) and gts (C, 1) f32 totals."""
    c, n = target_cn.shape
    t = _pick_tile(n, 32768)                      # mem-bound: big tiles
    fg, gts = pl.pallas_call(
        _fg_kernel,
        grid=(n // t,),
        in_specs=[pl.BlockSpec((c, t), lambda i: (0, i))],
        out_specs=[
            pl.BlockSpec((c, t), lambda i: (0, i)),
            pl.BlockSpec((c, 1), lambda i: (0, 0)),
        ],
        out_shape=[
            jax.ShapeDtypeStruct((c, n), jnp.bfloat16),
            jax.ShapeDtypeStruct((c, 1), jnp.float32),
        ],
        compiler_params=pltpu.CompilerParams(
            dimension_semantics=("arbitrary",)),   # gts is a carried reduction
    )(target_cn)
    return fg, gts


def _lovasz_losses_batched(nes_sorted, fg_sorted, gts):
    """Per-head, per-class losses (H, C, 1) from the sorted streams."""
    h, c, n = nes_sorted.shape
    t = _pick_tile(n, 2048)                       # scan-heavy: moderate tiles
    return pl.pallas_call(
        _lovasz_kernel,
        grid=(h, n // t),
        in_specs=[
            pl.BlockSpec((None, c, t), lambda hh, i: (hh, 0, i)),
            pl.BlockSpec((None, c, t), lambda hh, i: (hh, 0, i)),
            pl.BlockSpec((c, 1), lambda hh, i: (0, 0)),
        ],
        out_specs=pl.BlockSpec((None, c, 1), lambda hh, i: (hh, 0, 0)),
        out_shape=jax.ShapeDtypeStruct((h, c, 1), jnp.float32),
        scratch_shapes=[
            pltpu.VMEM((c, 1), jnp.float32),      # running cumsum(fg) prefix
            pltpu.VMEM((c, 1), jnp.float32),      # previous tile's last jaccard
        ],
        compiler_params=pltpu.CompilerParams(
            dimension_semantics=("parallel", "arbitrary")),
    )(nes_sorted, fg_sorted, gts)


def lovasz_loss_forward(pred, score, target, hyp):
    """Mirrors LovaszLoss.forward(pred, score, target)."""
    if hyp['model']['num_outputs'] == 1:
        score = [score]
    weights = hyp['train']['loss_balance_weights']
    assert len(weights) == len(score)

    # Foreground mask + per-class totals: computed once per batch, reused by
    # every prediction head.
    t_cn = _flatten_nchw_to_cn(target).astype(jnp.float32)
    fg, gts = _compute_fg_and_gts(t_cn)                   # (C,N) bf16, (C,1) f32
    fg32 = fg.astype(jnp.float32)

    pairs = list(zip(weights, pred))                      # matches torch zip()
    # Negated errors (single sort key).  abs/negate fuse with the NCHW->(C,N)
    # transpose into one HBM pass per head under jit (no standalone kernel).
    neg_err = jnp.stack(
        [-jnp.abs(fg32 - _flatten_nchw_to_cn(x).astype(jnp.float32))
         for _, x in pairs])                              # (H, C, N) f32
    h, c, n = neg_err.shape
    fg_b = jnp.broadcast_to(fg, (h, c, n))                # bf16 payload

    # Descending sort of errors == ascending sort of the negated key; fg rides
    # along as the only payload.  Tie order cannot change the loss value, so
    # the cheaper unstable variadic sort is used.
    # TODO(synk): descending key-value sort has no Pallas TPU primitive.
    nes_sorted, fg_sorted = lax.sort(
        (neg_err, fg_b), dimension=2, num_keys=1, is_stable=False)

    losses = _lovasz_losses_batched(nes_sorted, fg_sorted, gts)   # (H, C, 1)
    per_head = jnp.mean(losses[:, :, 0], axis=1)          # classes='all' mean
    w = jnp.asarray([float(wt) for wt, _ in pairs], jnp.float32)
    return jnp.sum(w * per_head)


# --------------------------------------------------------------------------
# Demo
# --------------------------------------------------------------------------

if __name__ == "__main__":
    key = jax.random.PRNGKey(0)
    B, C, H, W = 2, 4, 16, 16
    k1, k2, k3, k4, k5 = jax.random.split(key, 5)

    pred = [
        jax.random.normal(k1, (B, C, H, W), jnp.float32),
        jax.random.normal(k2, (B, C, H, W), jnp.float32),
    ]
    score = [
        jax.random.normal(k3, (B, C, H, W), jnp.float32),
        jax.random.normal(k4, (B, C, H, W), jnp.float32),
    ]
    # one-hot target, NCHW, like the module expects (argmax over dim=1)
    target = jax.nn.one_hot(
        jax.random.randint(k5, (B, H, W), 0, C), C, axis=1
    ).astype(jnp.float32)

    hyp = {
        'model': {'num_outputs': 2},
        'train': {'loss_balance_weights': [0.4, 1.0]},
    }

    # jit so the transpose/abs/negate/stack feeding the sort fuse into one pass
    loss_fn = jax.jit(lambda p, s, t: lovasz_loss_forward(p, s, t, hyp))
    loss = loss_fn(pred, score, target)
    jax.block_until_ready(loss)
    print("KERNEL_OK")
</pallas_src>

<mosaic_0001>
module attributes {stable_mosaic.version = 11 : i64} {
  func.func @_fg_kernel(%arg0: i32, %arg1: memref<4x512xf32, #tpu.memory_space<vmem>>, %arg2: memref<4x512xbf16, #tpu.memory_space<vmem>>, %arg3: memref<4x1xf32, #tpu.memory_space<vmem>>) attributes {dimension_semantics = [#tpu.dimension_semantics<arbitrary>], iteration_bounds = array<i64: 1>, scalar_prefetch = 0 : i64, scratch_operands = 0 : i64, tpu.core_type = #tpu.core_type<tc>, window_params = [{transform_indices = @transform_0, window_bounds = array<i64: 4, 512>}, {transform_indices = @transform_1, window_bounds = array<i64: 4, 512>}, {pipeline_mode = #tpu.pipeline_mode<synchronous>, transform_indices = @transform_2, window_bounds = array<i64: 4, 1>}]} {
    %c0_i32 = arith.constant 0 : i32
    %0 = arith.cmpi eq, %arg0, %c0_i32 : i32
    %1 = arith.extui %0 : i1 to i32
    %c0_i32_0 = arith.constant 0 : i32
    %2 = arith.cmpi ne, %1, %c0_i32_0 : i32
    scf.if %2 {
      %cst_10 = arith.constant 0.000000e+00 : f32
      %24 = vector.broadcast %cst_10 : f32 to vector<4x1xf32>
      %c0_11 = arith.constant 0 : index
      %c0_12 = arith.constant 0 : index
      %25 = vector.load %arg3[%c0_11, %c0_12] : memref<4x1xf32, #tpu.memory_space<vmem>>, vector<4x1xf32>
      tpu.vector_store %arg3[%c0_11, %c0_12], %24 {strides = array<i32>} : memref<4x1xf32, #tpu.memory_space<vmem>>, vector<4x1xf32>,
    } else {
    }
    %c0 = arith.constant 0 : index
    %c0_1 = arith.constant 0 : index
    %3 = vector.load %arg1[%c0, %c0_1] : memref<4x512xf32, #tpu.memory_space<vmem>>, vector<4x512xf32>
    %4 = tpu.iota {dimensions = array<i32: 0>} : vector<4x512xi32>
    %cst = arith.constant dense<0xFF800000> : vector<512xf32>
    %5 = vector.multi_reduction <maximumf>, %3, %cst [0] : vector<4x512xf32> to vector<512xf32>
    %6 = vector.shape_cast %5 : vector<512xf32> to vector<1x512xf32>
    %7 = vector.broadcast %6 : vector<1x512xf32> to vector<4x512xf32>
    %8 = arith.cmpf oeq, %3, %7 : vector<4x512xf32>
    %c4_i32 = arith.constant 4 : i32
    %9 = vector.broadcast %c4_i32 : i32 to vector<4x512xi32>
    %10 = arith.select %8, %4, %9 : vector<4x512xi1>, vector<4x512xi32>
    %cst_2 = arith.constant dense<2147483647> : vector<512xi32>
    %11 = vector.multi_reduction <minsi>, %10, %cst_2 [0] : vector<4x512xi32> to vector<512xi32>
    %12 = vector.shape_cast %11 : vector<512xi32> to vector<1x512xi32>
    %13 = vector.broadcast %12 : vector<1x512xi32> to vector<4x512xi32>
    %14 = arith.cmpi eq, %4, %13 : vector<4x512xi32>
    %15 = arith.extui %14 : vector<4x512xi1> to vector<4x512xi32>
    %16 = arith.sitofp %15 : vector<4x512xi32> to vector<4x512xf32>
    %17 = arith.truncf %16 : vector<4x512xf32> to vector<4x512xbf16>
    %c0_3 = arith.constant 0 : index
    %c0_4 = arith.constant 0 : index
    %18 = vector.load %arg2[%c0_3, %c0_4] : memref<4x512xbf16, #tpu.memory_space<vmem>>, vector<4x512xbf16>
    tpu.vector_store %arg2[%c0_3, %c0_4], %17 {strides = array<i32>} : memref<4x512xbf16, #tpu.memory_space<vmem>>, vector<4x512xbf16>,
    %c0_5 = arith.constant 0 : index
    %c0_6 = arith.constant 0 : index
    %19 = vector.load %arg3[%c0_5, %c0_6] : memref<4x1xf32, #tpu.memory_space<vmem>>, vector<4x1xf32>
    %cst_7 = arith.constant dense<0.000000e+00> : vector<4xf32>
    %20 = vector.multi_reduction <add>, %16, %cst_7 [1] : vector<4x512xf32> to vector<4xf32>
    %21 = vector.shape_cast %20 : vector<4xf32> to vector<4x1xf32>
    %22 = arith.addf %19, %21 : vector<4x1xf32>
    %c0_8 = arith.constant 0 : index
    %c0_9 = arith.constant 0 : index
    %23 = vector.load %arg3[%c0_8, %c0_9] : memref<4x1xf32, #tpu.memory_space<vmem>>, vector<4x1xf32>
    tpu.vector_store %arg3[%c0_8, %c0_9], %22 {strides = array<i32>} : memref<4x1xf32, #tpu.memory_space<vmem>>, vector<4x1xf32>,
    return
  }
  func.func @transform_0(%arg0: i32) -> (i32, i32) {
    %c0_i32 = arith.constant 0 : i32
    %c0_i32_0 = arith.constant 0 : i32
    return %c0_i32, %arg0 : i32, i32
  }
  func.func @transform_1(%arg0: i32) -> (i32, i32) {
    %c0_i32 = arith.constant 0 : i32
    %c0_i32_0 = arith.constant 0 : i32
    return %c0_i32, %arg0 : i32, i32
  }
  func.func @transform_2(%arg0: i32) -> (i32, i32) {
    %c0_i32 = arith.constant 0 : i32
    %c0_i32_0 = arith.constant 0 : i32
    %c0_i32_1 = arith.constant 0 : i32
    return %c0_i32, %c0_i32_0 : i32, i32
  }
}

module attributes {stable_mosaic.version = 11 : i64} {
  func.func @_lovasz_kernel(%arg0: i32, %arg1: i32, %arg2: memref<1x4x512xf32, #tpu.memory_space<vmem>>, %arg3: memref<1x4x512xbf16, #tpu.memory_space<vmem>>, %arg4: memref<4x1xf32, #tpu.memory_space<vmem>>, %arg5: memref<1x4x1xf32, #tpu.memory_space<vmem>>, %arg6: memref<4x1xf32, #tpu.memory_space<vmem>>, %arg7: memref<4x1xf32, #tpu.memory_space<vmem>>) attributes {dimension_semantics = [#tpu.dimension_semantics<parallel>, #tpu.dimension_semantics<arbitrary>], iteration_bounds = array<i64: 2, 1>, scalar_prefetch = 0 : i64, scratch_operands = 2 : i64, tpu.core_type = #tpu.core_type<tc>, window_params = [{transform_indices = @transform_0, window_bounds = array<i64: 1, 4, 512>}, {transform_indices = @transform_1, window_bounds = array<i64: 1, 4, 512>}, {pipeline_mode = #tpu.pipeline_mode<synchronous>, transform_indices = @transform_2, window_bounds = array<i64: 4, 1>}, {transform_indices = @transform_3, window_bounds = array<i64: 1, 4, 1>}]} {
    %c0_i32 = arith.constant 0 : i32
    %0 = arith.cmpi eq, %arg1, %c0_i32 : i32
    %1 = arith.extui %0 : i1 to i32
    %c0_i32_0 = arith.constant 0 : i32
    %2 = arith.cmpi ne, %1, %c0_i32_0 : i32
    scf.if %2 {
      %cst_45 = arith.constant 0.000000e+00 : f32
      %104 = vector.broadcast %cst_45 : f32 to vector<4x1xf32>
      %c0_46 = arith.constant 0 : index
      %c0_47 = arith.constant 0 : index
      %c0_48 = arith.constant 0 : index
      %105 = vector.load %arg5[%c0_46, %c0_47, %c0_48] : memref<1x4x1xf32, #tpu.memory_space<vmem>>, vector<1x4x1xf32>
      %106 = vector.shape_cast %105 : vector<1x4x1xf32> to vector<4x1xf32>
      %107 = vector.shape_cast %104 : vector<4x1xf32> to vector<1x4x1xf32>
      tpu.vector_store %arg5[%c0_46, %c0_47, %c0_48], %107 {strides = array<i32>} : memref<1x4x1xf32, #tpu.memory_space<vmem>>, vector<1x4x1xf32>,
      %cst_49 = arith.constant 0.000000e+00 : f32
      %108 = vector.broadcast %cst_49 : f32 to vector<4x1xf32>
      %c0_50 = arith.constant 0 : index
      %c0_51 = arith.constant 0 : index
      %109 = vector.load %arg6[%c0_50, %c0_51] : memref<4x1xf32, #tpu.memory_space<vmem>>, vector<4x1xf32>
      tpu.vector_store %arg6[%c0_50, %c0_51], %108 {strides = array<i32>} : memref<4x1xf32, #tpu.memory_space<vmem>>, vector<4x1xf32>,
      %cst_52 = arith.constant 0.000000e+00 : f32
      %110 = vector.broadcast %cst_52 : f32 to vector<4x1xf32>
      %c0_53 = arith.constant 0 : index
      %c0_54 = arith.constant 0 : index
      %111 = vector.load %arg7[%c0_53, %c0_54] : memref<4x1xf32, #tpu.memory_space<vmem>>, vector<4x1xf32>
      tpu.vector_store %arg7[%c0_53, %c0_54], %110 {strides = array<i32>} : memref<4x1xf32, #tpu.memory_space<vmem>>, vector<4x1xf32>,
    } else {
    }
    %c0 = arith.constant 0 : index
    %c0_1 = arith.constant 0 : index
    %c0_2 = arith.constant 0 : index
    %3 = vector.load %arg2[%c0, %c0_1, %c0_2] : memref<1x4x512xf32, #tpu.memory_space<vmem>>, vector<1x4x512xf32>
    %4 = vector.shape_cast %3 : vector<1x4x512xf32> to vector<4x512xf32>
    %cst = arith.constant 0.000000e+00 : f32
    %5 = vector.broadcast %cst : f32 to vector<4x512xf32>
    %6 = arith.subf %5, %4 : vector<4x512xf32>
    %c0_3 = arith.constant 0 : index
    %c0_4 = arith.constant 0 : index
    %c0_5 = arith.constant 0 : index
    %7 = vector.load %arg3[%c0_3, %c0_4, %c0_5] : memref<1x4x512xbf16, #tpu.memory_space<vmem>>, vector<1x4x512xbf16>
    %8 = vector.shape_cast %7 : vector<1x4x512xbf16> to vector<4x512xbf16>
    %9 = arith.extf %8 : vector<4x512xbf16> to vector<4x512xf32>
    %c0_6 = arith.constant 0 : index
    %c0_7 = arith.constant 0 : index
    %10 = vector.load %arg4[%c0_6, %c0_7] : memref<4x1xf32, #tpu.memory_space<vmem>>, vector<4x1xf32>
    %11 = tpu.iota {dimensions = array<i32: 1>} : vector<4x512xi32>
    %c1_i32 = arith.constant 1 : i32
    %12 = vector.broadcast %c1_i32 : i32 to vector<4x512xi32>
    %13 = arith.cmpi sge, %11, %12 : vector<4x512xi32>
    %c1_i32_8 = arith.constant 1 : i32
    %14 = tpu.dynamic_rotate %9 by %c1_i32_8 dim 1 : vector<4x512xf32>, i32 -> vector<4x512xf32>
    %cst_9 = arith.constant 0.000000e+00 : f32
    %15 = vector.broadcast %cst_9 : f32 to vector<4x512xf32>
    %16 = arith.select %13, %14, %15 : vector<4x512xi1>, vector<4x512xf32>
    %17 = arith.addf %9, %16 : vector<4x512xf32>
    %c2_i32 = arith.constant 2 : i32
    %18 = vector.broadcast %c2_i32 : i32 to vector<4x512xi32>
    %19 = arith.cmpi sge, %11, %18 : vector<4x512xi32>
    %c2_i32_10 = arith.constant 2 : i32
    %20 = tpu.dynamic_rotate %17 by %c2_i32_10 dim 1 : vector<4x512xf32>, i32 -> vector<4x512xf32>
    %cst_11 = arith.constant 0.000000e+00 : f32
    %21 = vector.broadcast %cst_11 : f32 to vector<4x512xf32>
    %22 = arith.select %19, %20, %21 : vector<4x512xi1>, vector<4x512xf32>
    %23 = arith.addf %17, %22 : vector<4x512xf32>
    %c4_i32 = arith.constant 4 : i32
    %24 = vector.broadcast %c4_i32 : i32 to vector<4x512xi32>
    %25 = arith.cmpi sge, %11, %24 : vector<4x512xi32>
    %c4_i32_12 = arith.constant 4 : i32
    %26 = tpu.dynamic_rotate %23 by %c4_i32_12 dim 1 : vector<4x512xf32>, i32 -> vector<4x512xf32>
    %cst_13 = arith.constant 0.000000e+00 : f32
    %27 = vector.broadcast %cst_13 : f32 to vector<4x512xf32>
    %28 = arith.select %25, %26, %27 : vector<4x512xi1>, vector<4x512xf32>
    %29 = arith.addf %23, %28 : vector<4x512xf32>
    %c8_i32 = arith.constant 8 : i32
    %30 = vector.broadcast %c8_i32 : i32 to vector<4x512xi32>
    %31 = arith.cmpi sge, %11, %30 : vector<4x512xi32>
    %c8_i32_14 = arith.constant 8 : i32
    %32 = tpu.dynamic_rotate %29 by %c8_i32_14 dim 1 : vector<4x512xf32>, i32 -> vector<4x512xf32>
    %cst_15 = arith.constant 0.000000e+00 : f32
    %33 = vector.broadcast %cst_15 : f32 to vector<4x512xf32>
    %34 = arith.select %31, %32, %33 : vector<4x512xi1>, vector<4x512xf32>
    %35 = arith.addf %29, %34 : vector<4x512xf32>
    %c16_i32 = arith.constant 16 : i32
    %36 = vector.broadcast %c16_i32 : i32 to vector<4x512xi32>
    %37 = arith.cmpi sge, %11, %36 : vector<4x512xi32>
    %c16_i32_16 = arith.constant 16 : i32
    %38 = tpu.dynamic_rotate %35 by %c16_i32_16 dim 1 : vector<4x512xf32>, i32 -> vector<4x512xf32>
    %cst_17 = arith.constant 0.000000e+00 : f32
    %39 = vector.broadcast %cst_17 : f32 to vector<4x512xf32>
    %40 = arith.select %37, %38, %39 : vector<4x512xi1>, vector<4x512xf32>
    %41 = arith.addf %35, %40 : vector<4x512xf32>
    %c32_i32 = arith.constant 32 : i32
    %42 = vector.broadcast %c32_i32 : i32 to vector<4x512xi32>
    %43 = arith.cmpi sge, %11, %42 : vector<4x512xi32>
    %c32_i32_18 = arith.constant 32 : i32
    %44 = tpu.dynamic_rotate %41 by %c32_i32_18 dim 1 : vector<4x512xf32>, i32 -> vector<4x512xf32>
    %cst_19 = arith.constant 0.000000e+00 : f32
    %45 = vector.broadcast %cst_19 : f32 to vector<4x512xf32>
    %46 = arith.select %43, %44, %45 : vector<4x512xi1>, vector<4x512xf32>
    %47 = arith.addf %41, %46 : vector<4x512xf32>
    %c64_i32 = arith.constant 64 : i32
    %48 = vector.broadcast %c64_i32 : i32 to vector<4x512xi32>
    %49 = arith.cmpi sge, %11, %48 : vector<4x512xi32>
    %c64_i32_20 = arith.constant 64 : i32
    %50 = tpu.dynamic_rotate %47 by %c64_i32_20 dim 1 : vector<4x512xf32>, i32 -> vector<4x512xf32>
    %cst_21 = arith.constant 0.000000e+00 : f32
    %51 = vector.broadcast %cst_21 : f32 to vector<4x512xf32>
    %52 = arith.select %49, %50, %51 : vector<4x512xi1>, vector<4x512xf32>
    %53 = arith.addf %47, %52 : vector<4x512xf32>
    %c128_i32 = arith.constant 128 : i32
    %54 = vector.broadcast %c128_i32 : i32 to vector<4x512xi32>
    %55 = arith.cmpi sge, %11, %54 : vector<4x512xi32>
    %c128_i32_22 = arith.constant 128 : i32
    %56 = tpu.dynamic_rotate %53 by %c128_i32_22 dim 1 : vector<4x512xf32>, i32 -> vector<4x512xf32>
    %cst_23 = arith.constant 0.000000e+00 : f32
    %57 = vector.broadcast %cst_23 : f32 to vector<4x512xf32>
    %58 = arith.select %55, %56, %57 : vector<4x512xi1>, vector<4x512xf32>
    %59 = arith.addf %53, %58 : vector<4x512xf32>
    %c256_i32 = arith.constant 256 : i32
    %60 = vector.broadcast %c256_i32 : i32 to vector<4x512xi32>
    %61 = arith.cmpi sge, %11, %60 : vector<4x512xi32>
    %c256_i32_24 = arith.constant 256 : i32
    %62 = tpu.dynamic_rotate %59 by %c256_i32_24 dim 1 : vector<4x512xf32>, i32 -> vector<4x512xf32>
    %cst_25 = arith.constant 0.000000e+00 : f32
    %63 = vector.broadcast %cst_25 : f32 to vector<4x512xf32>
    %64 = arith.select %61, %62, %63 : vector<4x512xi1>, vector<4x512xf32>
    %65 = arith.addf %59, %64 : vector<4x512xf32>
    %c0_26 = arith.constant 0 : index
    %c0_27 = arith.constant 0 : index
    %66 = vector.load %arg6[%c0_26, %c0_27] : memref<4x1xf32, #tpu.memory_space<vmem>>, vector<4x1xf32>
    %67 = vector.broadcast %66 : vector<4x1xf32> to vector<4x512xf32>
    %68 = arith.addf %67, %65 : vector<4x512xf32>
    %c512_i32 = arith.constant 512 : i32
    %69 = arith.muli %arg1, %c512_i32 : i32
    %70 = vector.broadcast %69 : i32 to vector<4x512xi32>
    %71 = arith.addi %70, %11 : vector<4x512xi32>
    %c1_i32_28 = arith.constant 1 : i32
    %72 = vector.broadcast %c1_i32_28 : i32 to vector<4x512xi32>
    %73 = arith.addi %71, %72 : vector<4x512xi32>
    %74 = arith.sitofp %73 : vector<4x512xi32> to vector<4x512xf32>
    %75 = vector.broadcast %10 : vector<4x1xf32> to vector<4x512xf32>
    %76 = arith.subf %75, %68 : vector<4x512xf32>
    %77 = arith.subf %74, %68 : vector<4x512xf32>
    %78 = vector.broadcast %10 : vector<4x1xf32> to vector<4x512xf32>
    %79 = arith.addf %78, %77 : vector<4x512xf32>
    %80 = arith.divf %76, %79 : vector<4x512xf32>
    %cst_29 = arith.constant 1.000000e+00 : f32
    %81 = vector.broadcast %cst_29 : f32 to vector<4x512xf32>
    %82 = arith.subf %81, %80 : vector<4x512xf32>
    %c1_i32_30 = arith.constant 1 : i32
    %83 = tpu.dynamic_rotate %82 by %c1_i32_30 dim 1 : vector<4x512xf32>, i32 -> vector<4x512xf32>
    %c0_i32_31 = arith.constant 0 : i32
    %84 = vector.broadcast %c0_i32_31 : i32 to vector<4x512xi32>
    %85 = arith.cmpi eq, %11, %84 : vector<4x512xi32>
    %c0_32 = arith.constant 0 : index
    %c0_33 = arith.constant 0 : index
    %86 = vector.load %arg7[%c0_32, %c0_33] : memref<4x1xf32, #tpu.memory_space<vmem>>, vector<4x1xf32>
    %87 = vector.shape_cast %86 : vector<4x1xf32> to vector<4x1xf32>
    %88 = vector.broadcast %87 : vector<4x1xf32> to vector<4x512xf32>
    %89 = arith.select %85, %88, %83 : vector<4x512xi1>, vector<4x512xf32>
    %c0_34 = arith.constant 0 : index
    %c0_35 = arith.constant 0 : index
    %c0_36 = arith.constant 0 : index
    %90 = vector.load %arg5[%c0_34, %c0_35, %c0_36] : memref<1x4x1xf32, #tpu.memory_space<vmem>>, vector<1x4x1xf32>
    %91 = vector.shape_cast %90 : vector<1x4x1xf32> to vector<4x1xf32>
    %92 = arith.subf %82, %89 : vector<4x512xf32>
    %93 = arith.mulf %6, %92 : vector<4x512xf32>
    %cst_37 = arith.constant dense<0.000000e+00> : vector<4xf32>
    %94 = vector.multi_reduction <add>, %93, %cst_37 [1] : vector<4x512xf32> to vector<4xf32>
    %95 = vector.shape_cast %94 : vector<4xf32> to vector<4x1xf32>
    %96 = arith.addf %91, %95 : vector<4x1xf32>
    %c0_38 = arith.constant 0 : index
    %c0_39 = arith.constant 0 : index
    %c0_40 = arith.constant 0 : index
    %97 = vector.load %arg5[%c0_38, %c0_39, %c0_40] : memref<1x4x1xf32, #tpu.memory_space<vmem>>, vector<1x4x1xf32>
    %98 = vector.shape_cast %97 : vector<1x4x1xf32> to vector<4x1xf32>
    %99 = vector.shape_cast %96 : vector<4x1xf32> to vector<1x4x1xf32>
    tpu.vector_store %arg5[%c0_38, %c0_39, %c0_40], %99 {strides = array<i32>} : memref<1x4x1xf32, #tpu.memory_space<vmem>>, vector<1x4x1xf32>,
    %100 = vector.extract_strided_slice %68 {offsets = [0, 511], sizes = [4, 1], strides = [1, 1]} : vector<4x512xf32> to vector<4x1xf32>
    %c0_41 = arith.constant 0 : index
    %c0_42 = arith.constant 0 : index
    %101 = vector.load %arg6[%c0_41, %c0_42] : memref<4x1xf32, #tpu.memory_space<vmem>>, vector<4x1xf32>
    tpu.vector_store %arg6[%c0_41, %c0_42], %100 {strides = array<i32>} : memref<4x1xf32, #tpu.memory_space<vmem>>, vector<4x1xf32>,
    %102 = vector.extract_strided_slice %82 {offsets = [0, 511], sizes = [4, 1], strides = [1, 1]} : vector<4x512xf32> to vector<4x1xf32>
    %c0_43 = arith.constant 0 : index
    %c0_44 = arith.constant 0 : index
    %103 = vector.load %arg7[%c0_43, %c0_44] : memref<4x1xf32, #tpu.memory_space<vmem>>, vector<4x1xf32>
    tpu.vector_store %arg7[%c0_43, %c0_44], %102 {strides = array<i32>} : memref<4x1xf32, #tpu.memory_space<vmem>>, vector<4x1xf32>,
    return
  }
  func.func @transform_0(%arg0: i32, %arg1: i32) -> (i32, i32, i32) {
    %c0_i32 = arith.constant 0 : i32
    %c0_i32_0 = arith.constant 0 : i32
    return %arg0, %c0_i32, %arg1 : i32, i32, i32
  }
  func.func @transform_1(%arg0: i32, %arg1: i32) -> (i32, i32, i32) {
    %c0_i32 = arith.constant 0 : i32
    %c0_i32_0 = arith.constant 0 : i32
    return %arg0, %c0_i32, %arg1 : i32, i32, i32
  }
  func.func @transform_2(%arg0: i32, %arg1: i32) -> (i32, i32) {
    %c0_i32 = arith.constant 0 : i32
    %c0_i32_0 = arith.constant 0 : i32
    %c0_i32_1 = arith.constant 0 : i32
    return %c0_i32, %c0_i32_0 : i32, i32
  }
  func.func @transform_3(%arg0: i32, %arg1: i32) -> (i32, i32, i32) {
    %c0_i32 = arith.constant 0 : i32
    %c0_i32_0 = arith.constant 0 : i32
    %c0_i32_1 = arith.constant 0 : i32
    return %arg0, %c0_i32, %c0_i32_0 : i32, i32, i32
  }
}

</mosaic_0001>

<llo_original>
// kernel: _lambda_.2
$region0: #{_lambda_.2}
  #allocation0 [shape = 'u32[]', space=smem, size = 0x4, offset = 0x4, fixed_abs, tag = 'smem constant byte address 0x4 - core index']
  #allocation1 [shape = 'u32[144,128]{1,0:T(1,128)}', space=vmem, size = 0x12000, scoped, tag = 'internal scratch']
  %s0 = inlined_call_operand.vmem [shape: f32[4,512], index: 0, kind: input, shape index: {}]
  %s1 = inlined_call_operand.vmem [shape: bf16[4,512], index: 1, kind: output, shape index: {0}]
  %s2 = inlined_call_operand.vmem [shape: f32[4,1], index: 2, kind: output, shape index: {1}]
  %3 = xla_tuple %s1, %s2
  %s4 = sld [smem:[#allocation0]]
  $region26: #{_lambda_.2} parent=0
    _
  %s6 = ssub.s32 1, %s4
  %s7 = scalar_select 0, %s6, %s4
  // Predicated region
  $region2: #{_lambda_.2} parent=0 // pred_check
    _
  $region3: #{_lambda_.2} parent=0 // pred_check_branch
    %9 = sbr.rel (0) target = $region5
  $region4: #{_lambda_.2} parent=0 // pred_region
    _
  $region5: #{_lambda_.2} parent=0 // pred_fallthru
    _
  %p10 = scmp.eq.s32.totalorder 0, 0
  // Predicated region
  $region6: #{_lambda_.2} parent=0 // pred_check
    %p11 = pneg %p10
  $region7: #{_lambda_.2} parent=0 // pred_check_branch
    %13 = sbr.rel (%p11) target = $region9
  $region8: #{_lambda_.2} parent=0 // pred_region
    %vm14 = vcmask 3072
    %15 = vst.msk [vmem:[%s2] sm:$0xf] %vm14, 0.0
  $region9: #{_lambda_.2} parent=0 // pred_fallthru
    _
  %v16 = vld [vmem:[%s0] sm:$0xff]
  %v17 = vld [vmem:[%s0 + $0x8] sm:$0xff]
  %v18 = vlaneseq
  %v19 = vshrl.u32 %v18, 7
  %v22 = vcombine.high %v16, %v16
  %v23 = vcombine.high %v17, %v17
  %vm26 = vcmask 1043456
  %v27 = vsel %vm26, %v16, -inf
  %v28 = vrot.slane %v27, 4
  %v29 = vmax.f32 %v27, %v28
  %v30 = vrot.slane %v29, 2
  %v31 = vmax.f32 %v29, %v30
  %v32 = vrot.slane %v31, 1
  %v33 = vmax.f32 %v31, %v32
  %v34 = vsel %vm26, %v22, -inf
  %v35 = vrot.slane %v34, 4
  %v36 = vmax.f32 %v34, %v35
  %v37 = vrot.slane %v36, 2
  %v38 = vmax.f32 %v36, %v37
  %v39 = vrot.slane %v38, 1
  %v40 = vmax.f32 %v38, %v39
  %v41 = vsel %vm26, %v17, -inf
  %v42 = vrot.slane %v41, 4
  %v43 = vmax.f32 %v41, %v42
  %v44 = vrot.slane %v43, 2
  %v45 = vmax.f32 %v43, %v44
  %v46 = vrot.slane %v45, 1
  %v47 = vmax.f32 %v45, %v46
  %v48 = vsel %vm26, %v23, -inf
  %v49 = vrot.slane %v48, 4
  %v50 = vmax.f32 %v48, %v49
  %v51 = vrot.slane %v50, 2
  %v52 = vmax.f32 %v50, %v51
  %v53 = vrot.slane %v52, 1
  %v54 = vmax.f32 %v52, %v53
  %v59 = vcombine.low %v33, %v40
  %v60 = vcombine.low %v47, %v54
  %vm63 = vcmp.eq.f32.partialorder %v16, %v59
  %vm64 = vcmp.eq.f32.partialorder %v17, %v60
  %v66 = vunpack.c.l.s4 839922192
  %v67 = vunpack.c.0.s8 %v66
  %v68 = vlaneseq
  %v69 = vshrl.u32 %v68, 7
  %v70 = vsub.s32 %v67, %v69
  %v71 = vrot.slane %v19, %v70
  %v72 = vsel %vm63, %v71, 4
  %v73 = vsel %vm64, %v71, 4
  %v74 = vcombine.high %v72, %v72
  %v75 = vcombine.high %v73, %v73
  %v76 = vsel %vm26, %v72, 2147483647
  %v77 = vrot.slane %v76, 4
  %vm78 = vcmp.lt.s32.totalorder %v76, %v77
  %v79 = vsel %vm78, %v76, %v77
  %v80 = vrot.slane %v79, 2
  %vm81 = vcmp.lt.s32.totalorder %v79, %v80
  %v82 = vsel %vm81, %v79, %v80
  %v83 = vrot.slane %v82, 1
  %vm84 = vcmp.lt.s32.totalorder %v82, %v83
  %v85 = vsel %vm84, %v82, %v83
  %v86 = vsel %vm26, %v74, 2147483647
  %v87 = vrot.slane %v86, 4
  %vm88 = vcmp.lt.s32.totalorder %v86, %v87
  %v89 = vsel %vm88, %v86, %v87
  %v90 = vrot.slane %v89, 2
  %vm91 = vcmp.lt.s32.totalorder %v89, %v90
  %v92 = vsel %vm91, %v89, %v90
  %v93 = vrot.slane %v92, 1
  %vm94 = vcmp.lt.s32.totalorder %v92, %v93
  %v95 = vsel %vm94, %v92, %v93
  %v96 = vsel %vm26, %v73, 2147483647
  %v97 = vrot.slane %v96, 4
  %vm98 = vcmp.lt.s32.totalorder %v96, %v97
  %v99 = vsel %vm98, %v96, %v97
  %v100 = vrot.slane %v99, 2
  %vm101 = vcmp.lt.s32.totalorder %v99, %v100
  %v102 = vsel %vm101, %v99, %v100
  %v103 = vrot.slane %v102, 1
  %vm104 = vcmp.lt.s32.totalorder %v102, %v103
  %v105 = vsel %vm104, %v102, %v103
  %v106 = vsel %vm26, %v75, 2147483647
  %v107 = vrot.slane %v106, 4
  %vm108 = vcmp.lt.s32.totalorder %v106, %v107
  %v109 = vsel %vm108, %v106, %v107
  %v110 = vrot.slane %v109, 2
  %vm111 = vcmp.lt.s32.totalorder %v109, %v110
  %v112 = vsel %vm111, %v109, %v110
  %v113 = vrot.slane %v112, 1
  %vm114 = vcmp.lt.s32.totalorder %v112, %v113
  %v115 = vsel %vm114, %v112, %v113
  %vm116 = vcmp.eq.s32.totalorder %v19, %v85
  %vm117 = vcmp.eq.s32.totalorder %v19, %v95
  %vm118 = vcmp.eq.s32.totalorder %v19, %v105
  %vm119 = vcmp.eq.s32.totalorder %v19, %v115
  %v120 = vsel %vm116, 1, 0
  %v121 = vsel %vm117, 1, 0
  %v122 = vsel %vm118, 1, 0
  %v123 = vsel %vm119, 1, 0
  %v124 = vcvt.s32.f32 %v120
  %v125 = vcvt.s32.f32 %v121
  %v126 = vcvt.s32.f32 %v122
  %v127 = vcvt.s32.f32 %v123
  %v128 = vpack.c.bf16 %v124, %v124
  %v129 = vpack.c.bf16 %v125, %v125
  %v130 = vpack.c.bf16 %v126, %v126
  %v131 = vpack.c.bf16 %v127, %v127
  %v136 = vcombine.low %v128, %v129
  %v137 = vcombine.low %v130, %v131
  %v139 = vunpack.c.l.s4 1983009808
  %v140 = vunpack.c.0.s8 %v139
  %v141 = vlaneseq
  %v142 = vshrl.u32 %v141, 7
  %v143 = vsub.s32 %v140, %v142
  %v144 = vrot.slane %v136, %v143
  %v146 = vunpack.c.l.s4 1983009808
  %v147 = vunpack.c.0.s8 %v146
  %v148 = vlaneseq
  %v149 = vshrl.u32 %v148, 7
  %v150 = vsub.s32 %v147, %v149
  %v151 = vrot.slane %v137, %v150
  %v152 = vcombine.low %v144, %v151
  %154 = vst [vmem:[%s1] sm:$0xff] %v152
  %v155 = vld [vmem:[%s2] sm:$0xf]
  %v156 = vsel %vm26, %v124, 0.0
  %v157 = vsel %vm26, %v125, 0.0
  %v158 = vadd.f32 %v156, %v157
  %v159 = vsel %vm26, %v126, 0.0
  %v160 = vadd.f32 %v158, %v159
  %v161 = vsel %vm26, %v127, 0.0
  %v162 = vadd.f32 %v160, %v161
  %163 = vadd.xlane.f32.xlu0 %v162
  %v164 = vpop.xlane.xlu0 %163
  %v165 = vadd.f32 %v155, %v164
  %vm166 = vcmask 3072
  %167 = vst.msk [vmem:[%s2] sm:$0xf] %vm166, %v165
  // Predicated region
  $region10: #{_lambda_.2} parent=0 // pred_check
    _
  $region11: #{_lambda_.2} parent=0 // pred_check_branch
    %169 = sbr.rel (0) target = $region13
  $region12: #{_lambda_.2} parent=0 // pred_region
    _
  $region13: #{_lambda_.2} parent=0 // pred_fallthru
    _
  // Predicated region
  $region14: #{_lambda_.2} parent=0 // pred_check
    _
  $region15: #{_lambda_.2} parent=0 // pred_check_branch
    %171 = sbr.rel (0) target = $region17
  $region16: #{_lambda_.2} parent=0 // pred_region
    _
  $region17: #{_lambda_.2} parent=0 // pred_fallthru
    _
  // Predicated region
  $region18: #{_lambda_.2} parent=0 // pred_check
    _
  $region19: #{_lambda_.2} parent=0 // pred_check_branch
    %173 = sbr.rel (0) target = $region21
  $region20: #{_lambda_.2} parent=0 // pred_region
    _
  $region21: #{_lambda_.2} parent=0 // pred_fallthru
    _
  // Predicated region
  $region22: #{_lambda_.2} parent=0 // pred_check
    _
  $region23: #{_lambda_.2} parent=0 // pred_check_branch
    %175 = sbr.rel (0) target = $region25
  $region24: #{_lambda_.2} parent=0 // pred_region
    _
  $region25: #{_lambda_.2} parent=0 // pred_fallthru
    _

// kernel: _lambda_.3
$region0: #{_lambda_.3}
  #allocation0 [shape = 'u32[]', space=smem, size = 0x4, offset = 0x4, fixed_abs, tag = 'smem constant byte address 0x4 - core index']
  #allocation1 [shape = 'u32[144,128]{1,0:T(1,128)}', space=vmem, size = 0x12000, scoped, tag = 'internal scratch']
  #allocation2 [shape = 'f32[4,1]{1,0:T(4,128)}', space=vmem, size = 0x800, scoped, tag = 'scratch operand']
  #allocation3 [shape = 'f32[4,1]{1,0:T(4,128)}', space=vmem, size = 0x800, scoped, tag = 'scratch operand']
  %s0 = inlined_call_operand.vmem [shape: f32[2,4,512], index: 0, kind: input, shape index: {}]
  %s1 = inlined_call_operand.vmem [shape: bf16[2,4,512], index: 1, kind: input, shape index: {}]
  %s2 = inlined_call_operand.vmem [shape: f32[4,1], index: 2, kind: input, shape index: {}]
  %s3 = inlined_call_operand.vmem [shape: f32[2,4,1], index: 3, kind: output, shape index: {}]
  %s4 = sld [smem:[#allocation0]]
  $region49: #{_lambda_.3} parent=0
    _
  %s6 = ssub.s32 1, %s4
  %s7 = scalar_select 0, %s6, %s4
  loop: start=0, step=1, limit=4
  $region2: #{_lambda_.3} parent=0 // loop_pre_header
    _
  $region3: #{_lambda_.3} parent=0 // loop_header
    %s9 = sphi 0, %s13
    %p10 = scmp.ge.s32.totalorder %s9, 4
    %s16 = sphi 0, %s28
    %s17 = sphi 0, %s24
    %s18 = sphi 0, %s16
    %s19 = sphi 0, %s17
    %s20 = sphi 0, %s18
    %s21 = sphi 0, %s19
    %s33 = sphi 0, %s35
    %s36 = sphi 0, %s33
    %s37 = sphi 0, %s36
    %s53 = sphi 0, %s37
    %s61 = sphi 0, %s63
    %s64 = sphi 0, %s61
    %s65 = sphi 0, %s64
    %s81 = sphi 0, %s65
    %s85 = sphi 0, %s85
    %s87 = sphi 0, %s85
    %s88 = sphi 0, %s87
    %s102 = sphi 0, %s88
    %s108 = sphi 0, %s110
    %s111 = sphi 0, %s108
    %s112 = sphi 0, %s111
    %s128 = sphi 0, %s112
  $region4: #{_lambda_.3} parent=0 // loop_header_branch
    %12 = sbr.rel (%p10) target = $region8
  $region5: #{_lambda_.3} parent=0 // loop_body
    %s14 = ssub.s32 %s9, 1
    %s15 = ssub.s32 %s9, 2
    %s22 = sadd.s32 1, %s17
    %p23 = scmp.ge.s32.totalorder %s22, 1
    %s24 = scalar_select %p23, 0, %s22
    %s25 = sadd.s32 1, %s16
    %s26 = scalar_select %p23, %s25, %s16
    %p27 = scmp.ge.s32.totalorder %s26, 2
    %s28 = scalar_select %p27, 0, %s26
    %s29 = ssub.s32 %s16, %s28
    %s30 = ssub.s32 %s17, %s24
    %s31 = sor.u32 %s29, %s30
    %p32 = scmp.eq.s32.totalorder %s31, 0
    %s34 = sadd.s32 %s33, 1
    %s35 = scalar_select %p32, %s33, %s34
    %p38 = pneg %p32
    %p39 = scmp.eq.s32.totalorder %s9, 1
    %p40 = por %p38, %p39
    %p41 = scmp.ne.s32.totalorder %s33, %s36
    %p42 = scmp.eq.s32.totalorder %s9, 0
    %p43 = por %p41, %p42
    %p44 = scmp.ne.s32.totalorder %s33, %s36
    %p45 = scmp.eq.s32.totalorder %s14, 1
    %p46 = por %p44, %p45
    %p47 = scmp.ne.s32.totalorder %s36, %s37
    %p48 = scmp.eq.s32.totalorder %s14, 0
    %p49 = por %p47, %p48
    %p50 = scmp.ne.s32.totalorder %s36, %s37
    %p51 = scmp.eq.s32.totalorder %s15, 1
    %p52 = por %p50, %p51
    %p54 = scmp.ne.s32.totalorder %s37, %s53
    %p55 = scmp.eq.s32.totalorder %s15, 0
    %p56 = por %p54, %p55
    %s57 = ssub.s32 %s16, %s28
    %s58 = ssub.s32 %s17, %s24
    %s59 = sor.u32 %s57, %s58
    %p60 = scmp.eq.s32.totalorder %s59, 0
    %s62 = sadd.s32 %s61, 1
    %s63 = scalar_select %p60, %s61, %s62
    %p66 = pneg %p60
    %p67 = scmp.eq.s32.totalorder %s9, 1
    %p68 = por %p66, %p67
    %p69 = scmp.ne.s32.totalorder %s61, %s64
    %p70 = scmp.eq.s32.totalorder %s9, 0
    %p71 = por %p69, %p70
    %p72 = scmp.ne.s32.totalorder %s61, %s64
    %p73 = scmp.eq.s32.totalorder %s14, 1
    %p74 = por %p72, %p73
    %p75 = scmp.ne.s32.totalorder %s64, %s65
    %p76 = scmp.eq.s32.totalorder %s14, 0
    %p77 = por %p75, %p76
    %p78 = scmp.ne.s32.totalorder %s64, %s65
    %p79 = scmp.eq.s32.totalorder %s15, 1
    %p80 = por %p78, %p79
    %p82 = scmp.ne.s32.totalorder %s65, %s81
    %p83 = scmp.eq.s32.totalorder %s15, 0
    %p84 = por %p82, %p83
    %s86 = sadd.s32 %s85, 1
    %p89 = scmp.eq.s32.totalorder %s9, 1
    %p90 = scmp.ne.s32.totalorder %s85, %s87
    %p91 = scmp.eq.s32.totalorder %s9, 0
    %p92 = por %p90, %p91
    %p93 = scmp.ne.s32.totalorder %s85, %s87
    %p94 = scmp.eq.s32.totalorder %s14, 1
    %p95 = por %p93, %p94
    %p96 = scmp.ne.s32.totalorder %s87, %s88
    %p97 = scmp.eq.s32.totalorder %s14, 0
    %p98 = por %p96, %p97
    %p99 = scmp.ne.s32.totalorder %s87, %s88
    %p100 = scmp.eq.s32.totalorder %s15, 1
    %p101 = por %p99, %p100
    %p103 = scmp.ne.s32.totalorder %s88, %s102
    %p104 = scmp.eq.s32.totalorder %s15, 0
    %p105 = por %p103, %p104
    %s106 = ssub.s32 %s16, %s28
    %p107 = scmp.eq.s32.totalorder %s106, 0
    %s109 = sadd.s32 %s108, 1
    %s110 = scalar_select %p107, %s108, %s109
    %p113 = pneg %p107
    %p114 = scmp.eq.s32.totalorder %s9, 1
    %p115 = por %p113, %p114
    %p116 = scmp.ne.s32.totalorder %s108, %s111
    %p117 = scmp.eq.s32.totalorder %s9, 0
    %p118 = por %p116, %p117
    %p119 = scmp.ne.s32.totalorder %s108, %s111
    %p120 = scmp.eq.s32.totalorder %s14, 1
    %p121 = por %p119, %p120
    %p122 = scmp.ne.s32.totalorder %s111, %s112
    %p123 = scmp.eq.s32.totalorder %s14, 0
    %p124 = por %p122, %p123
    %p125 = scmp.ne.s32.totalorder %s111, %s112
    %p126 = scmp.eq.s32.totalorder %s15, 1
    %p127 = por %p125, %p126
    %p129 = scmp.ne.s32.totalorder %s112, %s128
    %p130 = scmp.eq.s32.totalorder %s15, 0
    %p131 = por %p129, %p130
    %p132 = scmp.le.s32.totalorder 1, %s9
    %p133 = scmp.lt.s32.totalorder %s9, 3
    %p134 = pnand %p132, %p133
    %p135 = pneg %p134
    // Predicated region
    $region9: #{_lambda_.3} parent=5 // pred_check
      _
    $region10: #{_lambda_.3} parent=5 // pred_check_branch
      %137 = sbr.rel (%p134) target = $region12
    $region11: #{_lambda_.3} parent=5 // pred_region
      %s138 = ssub.s32 %s9, 1
      // Predicated region
      $region13: #{_lambda_.3} parent=11 // pred_check
        %p139 = pneg %p98
      $region14: #{_lambda_.3} parent=11 // pred_check_branch
        %141 = sbr.rel (%p139) target = $region16
      $region15: #{_lambda_.3} parent=11 // pred_region
        _
      $region16: #{_lambda_.3} parent=11 // pred_fallthru
        _
    $region12: #{_lambda_.3} parent=5 // pred_fallthru
      _
    %p142 = scmp.lt.s32.totalorder %s9, 2
    // Predicated region
    $region17: #{_lambda_.3} parent=5 // pred_check
      %p143 = pneg %p142
    $region18: #{_lambda_.3} parent=5 // pred_check_branch
      %145 = sbr.rel (%p143) target = $region20
    $region19: #{_lambda_.3} parent=5 // pred_region
      // Predicated region
      $region21: #{_lambda_.3} parent=19 // pred_check
        %p146 = pneg %p43
      $region22: #{_lambda_.3} parent=19 // pred_check_branch
        %148 = sbr.rel (%p146) target = $region24
      $region23: #{_lambda_.3} parent=19 // pred_region
        %s149 = smul.u32 4, %s17
        %p150 = scmp.lt.s32.totalorder %s16, 1
        %s151 = scalar_select %p150, %s16, 1
        %p152 = scmp.lt.s32.totalorder %s149, 3
        %s153 = scalar_select %p152, %s149, 3
        %s154 = smul.addr %s151, 4
        %s155 = sadd.s32 %s153, %s154
        %s156 = smul.addr %s155, 4
        %s157 = scalar_lea.vmem %s0, %s156
        %s158 = smul.u32 4, %s17
      $region24: #{_lambda_.3} parent=19 // pred_fallthru
        _
      // Predicated region
      $region25: #{_lambda_.3} parent=19 // pred_check
        %p159 = pneg %p71
      $region26: #{_lambda_.3} parent=19 // pred_check_branch
        %161 = sbr.rel (%p159) target = $region28
      $region27: #{_lambda_.3} parent=19 // pred_region
        %s162 = smul.u32 4, %s17
        %p163 = scmp.lt.s32.totalorder %s16, 1
        %s164 = scalar_select %p163, %s16, 1
        %p165 = scmp.lt.s32.totalorder %s162, 3
        %s166 = scalar_select %p165, %s162, 3
        %s167 = smul.addr %s164, 4
        %s168 = sadd.s32 %s166, %s167
        %s169 = smul.addr %s168, 2
        %s170 = scalar_lea.vmem %s1, %s169
        %s171 = smul.u32 4, %s17
      $region28: #{_lambda_.3} parent=19 // pred_fallthru
        _
    $region20: #{_lambda_.3} parent=5 // pred_fallthru
      _
    %p172 = scmp.le.s32.totalorder 1, %s9
    %p173 = scmp.lt.s32.totalorder %s9, 3
    %p174 = pnand %p172, %p173
    %p175 = pneg %p174
    // Predicated region
    $region29: #{_lambda_.3} parent=5 // pred_check
      _
    $region30: #{_lambda_.3} parent=5 // pred_check_branch
      %177 = sbr.rel (%p174) target = $region32
    $region31: #{_lambda_.3} parent=5 // pred_region
      %s178 = ssub.s32 %s9, 1
      %s179 = smul.u32 4, %s19
      %p180 = scmp.lt.s32.totalorder %s18, 1
      %s181 = scalar_select %p180, %s18, 1
      %p182 = scmp.lt.s32.totalorder %s179, 3
      %s183 = scalar_select %p182, %s179, 3
      %s184 = smul.addr %s181, 4
      %s185 = sadd.s32 %s183, %s184
      %s186 = smul.addr %s185, 4
      %s187 = scalar_lea.vmem %s0, %s186
      %p188 = pneg %p49
      %p189 = pneg %p46
      %s190 = smul.u32 4, %s19
      %p191 = scmp.lt.s32.totalorder %s18, 1
      %s192 = scalar_select %p191, %s18, 1
      %p193 = scmp.lt.s32.totalorder %s190, 3
      %s194 = scalar_select %p193, %s190, 3
      %s195 = smul.addr %s192, 4
      %s196 = sadd.s32 %s194, %s195
      %s197 = smul.addr %s196, 2
      %s198 = scalar_lea.vmem %s1, %s197
      %p199 = pneg %p77
      %p200 = pneg %p74
      %p201 = pneg %p98
      %p202 = pneg %p95
      %p203 = pneg %p124
      %p204 = pneg %p121
      %p205 = scmp.lt.s32.totalorder %s18, 1
      %s206 = scalar_select %p205, %s18, 1
      %s207 = smul.addr %s206, 4
      %s208 = scalar_lea.vmem %s3, %s207
      %s209 = smul.u32 4, %s19
      %p210 = scmp.lt.s32.totalorder %s18, 1
      %s211 = scalar_select %p210, %s18, 1
      %p212 = scmp.lt.s32.totalorder %s209, 3
      %s213 = scalar_select %p212, %s209, 3
      %s214 = smul.addr %s211, 4
      %s215 = sadd.s32 %s213, %s214
      %s216 = smul.addr %s215, 4
      %s217 = scalar_lea.vmem %s0, %s216
      %s218 = smul.u32 4, %s19
      %s219 = smul.u32 4, %s19
      %p220 = scmp.lt.s32.totalorder %s18, 1
      %s221 = scalar_select %p220, %s18, 1
      %p222 = scmp.lt.s32.totalorder %s219, 3
      %s223 = scalar_select %p222, %s219, 3
      %s224 = smul.addr %s221, 4
      %s225 = sadd.s32 %s223, %s224
      %s226 = smul.addr %s225, 2
      %s227 = scalar_lea.vmem %s1, %s226
      %s228 = smul.u32 4, %s19
      %p229 = scmp.lt.s32.totalorder %s18, 1
      %s230 = scalar_select %p229, %s18, 1
      %s231 = smul.addr %s230, 4
      %s232 = scalar_lea.vmem %s3, %s231
      %p233 = scmp.eq.s32.totalorder %s19, 0
      // Predicated region
      $region33: #{_lambda_.3} parent=31 // pred_check
        %p234 = pneg %p233
      $region34: #{_lambda_.3} parent=31 // pred_check_branch
        %236 = sbr.rel (%p234) target = $region36
      $region35: #{_lambda_.3} parent=31 // pred_region
        %vm237 = vcmask 3072
        %238 = vst.msk [vmem:[%s232] sm:$0xf] %vm237, 0.0
        %239 = vst.msk [vmem:[#allocation2] sm:$0xf] %vm237, 0.0
        %240 = vst.msk [vmem:[#allocation3] sm:$0xf] %vm237, 0.0
      $region36: #{_lambda_.3} parent=31 // pred_fallthru
        _
      %v241 = vld [vmem:[%s217] sm:$0xff]
      %v242 = vld [vmem:[%s217 + $0x8] sm:$0xff]
      %v243 = vsub.f32 0.0, %v241
      %v244 = vsub.f32 0.0, %v242
      %v245 = vld [vmem:[%s227] sm:$0xff]
      %v246 = vunpack.c.l.bf16 %v245
      %v247 = vunpack.c.h.bf16 %v245
      %v248 = vld [vmem:[%s2] sm:$0xf]
      %v249 = vlaneseq
      %v250 = vand.u32 %v249, 127
      %v251 = vadd.s32 %v250, 128
      %v252 = vadd.s32 %v250, 256
      %v253 = vadd.s32 %v250, 384
      %vm254 = vcmp.ge.s32.totalorder %v250, 1
      %vm255 = vcmp.ge.s32.totalorder %v251, 1
      %vm256 = vcmp.ge.s32.totalorder %v252, 1
      %vm257 = vcmp.ge.s32.totalorder %v253, 1
      %v260 = vcombine.high %v246, %v246
      %v261 = vcombine.high %v247, %v247
      %264 = vrot.lane.b32.xlu0 %v246, 1
      %v265 = vpop.permute.xlu0 %264
      %266 = vrot.lane.b32.xlu0 %v260, 1
      %v267 = vpop.permute.xlu0 %266
      %268 = vrot.lane.b32.xlu0 %v247, 1
      %v269 = vpop.permute.xlu0 %268
      %270 = vrot.lane.b32.xlu0 %v261, 1
      %v271 = vpop.permute.xlu0 %270
      %vm272 = vcmp.lt.s32.totalorder %v250, 1
      %v273 = vsel %vm272, %v269, %v271
      %v274 = vsel %vm272, %v267, %v269
      %v275 = vsel %vm272, %v265, %v267
      %v276 = vsel %vm272, %v271, %v265
      %v277 = vsel %vm254, %v276, 0.0
      %v278 = vsel %vm255, %v275, 0.0
      %v279 = vsel %vm256, %v274, 0.0
      %v280 = vsel %vm257, %v273, 0.0
      %v285 = vcombine.low %v277, %v278
      %v286 = vcombine.low %v279, %v280
      %v289 = vadd.f32 %v246, %v285
      %v290 = vadd.f32 %v247, %v286
      %vm291 = vcmp.ge.s32.totalorder %v250, 2
      %vm292 = vcmp.ge.s32.totalorder %v251, 2
      %vm293 = vcmp.ge.s32.totalorder %v252, 2
      %vm294 = vcmp.ge.s32.totalorder %v253, 2
      %v297 = vcombine.high %v289, %v289
      %v298 = vcombine.high %v290, %v290
      %301 = vrot.lane.b32.xlu0 %v289, 2
      %v302 = vpop.permute.xlu0 %301
      %303 = vrot.lane.b32.xlu0 %v297, 2
      %v304 = vpop.permute.xlu0 %303
      %305 = vrot.lane.b32.xlu0 %v290, 2
      %v306 = vpop.permute.xlu0 %305
      %307 = vrot.lane.b32.xlu0 %v298, 2
      %v308 = vpop.permute.xlu0 %307
      %vm309 = vcmp.lt.s32.totalorder %v250, 2
      %v310 = vsel %vm309, %v306, %v308
      %v311 = vsel %vm309, %v304, %v306
      %v312 = vsel %vm309, %v302, %v304
      %v313 = vsel %vm309, %v308, %v302
      %v314 = vsel %vm291, %v313, 0.0
      %v315 = vsel %vm292, %v312, 0.0
      %v316 = vsel %vm293, %v311, 0.0
      %v317 = vsel %vm294, %v310, 0.0
      %v322 = vcombine.low %v314, %v315
      %v323 = vcombine.low %v316, %v317
      %v326 = vadd.f32 %v289, %v322
      %v327 = vadd.f32 %v290, %v323
      %vm328 = vcmp.ge.s32.totalorder %v250, 4
      %vm329 = vcmp.ge.s32.totalorder %v251, 4
      %vm330 = vcmp.ge.s32.totalorder %v252, 4
      %vm331 = vcmp.ge.s32.totalorder %v253, 4
      %v334 = vcombine.high %v326, %v326
      %v335 = vcombine.high %v327, %v327
      %338 = vrot.lane.b32.xlu0 %v326, 4
      %v339 = vpop.permute.xlu0 %338
      %340 = vrot.lane.b32.xlu0 %v334, 4
      %v341 = vpop.permute.xlu0 %340
      %342 = vrot.lane.b32.xlu0 %v327, 4
      %v343 = vpop.permute.xlu0 %342
      %344 = vrot.lane.b32.xlu0 %v335, 4
      %v345 = vpop.permute.xlu0 %344
      %vm346 = vcmp.lt.s32.totalorder %v250, 4
      %v347 = vsel %vm346, %v343, %v345
      %v348 = vsel %vm346, %v341, %v343
      %v349 = vsel %vm346, %v339, %v341
      %v350 = vsel %vm346, %v345, %v339
      %v351 = vsel %vm328, %v350, 0.0
      %v352 = vsel %vm329, %v349, 0.0
      %v353 = vsel %vm330, %v348, 0.0
      %v354 = vsel %vm331, %v347, 0.0
      %v359 = vcombine.low %v351, %v352
      %v360 = vcombine.low %v353, %v354
      %v363 = vadd.f32 %v326, %v359
      %v364 = vadd.f32 %v327, %v360
      %vm365 = vcmp.ge.s32.totalorder %v250, 8
      %vm366 = vcmp.ge.s32.totalorder %v251, 8
      %vm367 = vcmp.ge.s32.totalorder %v252, 8
      %vm368 = vcmp.ge.s32.totalorder %v253, 8
      %v371 = vcombine.high %v363, %v363
      %v372 = vcombine.high %v364, %v364
      %375 = vrot.lane.b32.xlu0 %v363, 8
      %v376 = vpop.permute.xlu0 %375
      %377 = vrot.lane.b32.xlu0 %v371, 8
      %v378 = vpop.permute.xlu0 %377
      %379 = vrot.lane.b32.xlu0 %v364, 8
      %v380 = vpop.permute.xlu0 %379
      %381 = vrot.lane.b32.xlu0 %v372, 8
      %v382 = vpop.permute.xlu0 %381
      %vm383 = vcmp.lt.s32.totalorder %v250, 8
      %v384 = vsel %vm383, %v380, %v382
      %v385 = vsel %vm383, %v378, %v380
      %v386 = vsel %vm383, %v376, %v378
      %v387 = vsel %vm383, %v382, %v376
      %v388 = vsel %vm365, %v387, 0.0
      %v389 = vsel %vm366, %v386, 0.0
      %v390 = vsel %vm367, %v385, 0.0
      %v391 = vsel %vm368, %v384, 0.0
      %v396 = vcombine.low %v388, %v389
      %v397 = vcombine.low %v390, %v391
      %v400 = vadd.f32 %v363, %v396
      %v401 = vadd.f32 %v364, %v397
      %vm402 = vcmp.ge.s32.totalorder %v250, 16
      %vm403 = vcmp.ge.s32.totalorder %v251, 16
      %vm404 = vcmp.ge.s32.totalorder %v252, 16
      %vm405 = vcmp.ge.s32.totalorder %v253, 16
      %v408 = vcombine.high %v400, %v400
      %v409 = vcombine.high %v401, %v401
      %412 = vrot.lane.b32.xlu0 %v400, 16
      %v413 = vpop.permute.xlu0 %412
      %414 = vrot.lane.b32.xlu0 %v408, 16
      %v415 = vpop.permute.xlu0 %414
      %416 = vrot.lane.b32.xlu0 %v401, 16
      %v417 = vpop.permute.xlu0 %416
      %418 = vrot.lane.b32.xlu0 %v409, 16
      %v419 = vpop.permute.xlu0 %418
      %vm420 = vcmp.lt.s32.totalorder %v250, 16
      %v421 = vsel %vm420, %v417, %v419
      %v422 = vsel %vm420, %v415, %v417
      %v423 = vsel %vm420, %v413, %v415
      %v424 = vsel %vm420, %v419, %v413
      %v425 = vsel %vm402, %v424, 0.0
      %v426 = vsel %vm403, %v423, 0.0
      %v427 = vsel %vm404, %v422, 0.0
      %v428 = vsel %vm405, %v421, 0.0
      %v433 = vcombine.low %v425, %v426
      %v434 = vcombine.low %v427, %v428
      %v437 = vadd.f32 %v400, %v433
      %v438 = vadd.f32 %v401, %v434
      %vm439 = vcmp.ge.s32.totalorder %v250, 32
      %vm440 = vcmp.ge.s32.totalorder %v251, 32
      %vm441 = vcmp.ge.s32.totalorder %v252, 32
      %vm442 = vcmp.ge.s32.totalorder %v253, 32
      %v445 = vcombine.high %v437, %v437
      %v446 = vcombine.high %v438, %v438
      %449 = vrot.lane.b32.xlu0 %v437, 32
      %v450 = vpop.permute.xlu0 %449
      %451 = vrot.lane.b32.xlu0 %v445, 32
      %v452 = vpop.permute.xlu0 %451
      %453 = vrot.lane.b32.xlu0 %v438, 32
      %v454 = vpop.permute.xlu0 %453
      %455 = vrot.lane.b32.xlu0 %v446, 32
      %v456 = vpop.permute.xlu0 %455
      %vm457 = vcmp.lt.s32.totalorder %v250, 32
      %v458 = vsel %vm457, %v454, %v456
      %v459 = vsel %vm457, %v452, %v454
      %v460 = vsel %vm457, %v450, %v452
      %v461 = vsel %vm457, %v456, %v450
      %v462 = vsel %vm439, %v461, 0.0
      %v463 = vsel %vm440, %v460, 0.0
      %v464 = vsel %vm441, %v459, 0.0
      %v465 = vsel %vm442, %v458, 0.0
      %v470 = vcombine.low %v462, %v463
      %v471 = vcombine.low %v464, %v465
      %v474 = vadd.f32 %v437, %v470
      %v475 = vadd.f32 %v438, %v471
      %vm476 = vcmp.ge.s32.totalorder %v250, 64
      %vm477 = vcmp.ge.s32.totalorder %v251, 64
      %vm478 = vcmp.ge.s32.totalorder %v252, 64
      %vm479 = vcmp.ge.s32.totalorder %v253, 64
      %v482 = vcombine.high %v474, %v474
      %v483 = vcombine.high %v475, %v475
      %486 = vrot.lane.b32.xlu0 %v474, 64
      %v487 = vpop.permute.xlu0 %486
      %488 = vrot.lane.b32.xlu0 %v482, 64
      %v489 = vpop.permute.xlu0 %488
      %490 = vrot.lane.b32.xlu0 %v475, 64
      %v491 = vpop.permute.xlu0 %490
      %492 = vrot.lane.b32.xlu0 %v483, 64
      %v493 = vpop.permute.xlu0 %492
      %vm494 = vcmp.lt.s32.totalorder %v250, 64
      %v495 = vsel %vm494, %v491, %v493
      %v496 = vsel %vm494, %v489, %v491
      %v497 = vsel %vm494, %v487, %v489
      %v498 = vsel %vm494, %v493, %v487
      %v499 = vsel %vm476, %v498, 0.0
      %v500 = vsel %vm477, %v497, 0.0
      %v501 = vsel %vm478, %v496, 0.0
      %v502 = vsel %vm479, %v495, 0.0
      %v507 = vcombine.low %v499, %v500
      %v508 = vcombine.low %v501, %v502
      %v511 = vadd.f32 %v474, %v507
      %v512 = vadd.f32 %v475, %v508
      %vm513 = vcmp.ge.s32.totalorder %v250, 128
      %vm514 = vcmp.ge.s32.totalorder %v251, 128
      %vm515 = vcmp.ge.s32.totalorder %v252, 128
      %vm516 = vcmp.ge.s32.totalorder %v253, 128
      %v519 = vcombine.high %v511, %v511
      %v520 = vcombine.high %v512, %v512
      %v523 = vsel %vm513, %v520, 0.0
      %v524 = vsel %vm514, %v511, 0.0
      %v525 = vsel %vm515, %v519, 0.0
      %v526 = vsel %vm516, %v512, 0.0
      %v531 = vcombine.low %v523, %v524
      %v532 = vcombine.low %v525, %v526
      %v535 = vadd.f32 %v511, %v531
      %v536 = vadd.f32 %v512, %v532
      %vm537 = vcmp.ge.s32.totalorder %v250, 256
      %vm538 = vcmp.ge.s32.totalorder %v251, 256
      %vm539 = vcmp.ge.s32.totalorder %v252, 256
      %vm540 = vcmp.ge.s32.totalorder %v253, 256
      %v543 = vcombine.high %v535, %v535
      %v544 = vcombine.high %v536, %v536
      %v547 = vsel %vm537, %v536, 0.0
      %v548 = vsel %vm538, %v544, 0.0
      %v549 = vsel %vm539, %v535, 0.0
      %v550 = vsel %vm540, %v543, 0.0
      %v555 = vcombine.low %v547, %v548
      %v556 = vcombine.low %v549, %v550
      %v559 = vadd.f32 %v535, %v555
      %v560 = vadd.f32 %v536, %v556
      %v561 = vld [vmem:[#allocation2] sm:$0xf]
      %563 = vset.pattern.permute.xlu0 0
      %564 = vperm.xlu0 %563, %v561
      %v565 = vpop.permute.xlu0 %564
      %v569 = vcombine.high %v559, %v559
      %v570 = vcombine.high %v560, %v560
      %v573 = vadd.f32 %v565, %v559
      %v574 = vadd.f32 %v565, %v569
      %v575 = vadd.f32 %v565, %v560
      %v576 = vadd.f32 %v565, %v570
      %s577 = smul.u32 %s19, 512
      %v578 = vstv %s577
      %v579 = vadd.s32 %v578, %v250
      %v580 = vadd.s32 %v578, %v251
      %v581 = vadd.s32 %v578, %v252
      %v582 = vadd.s32 %v578, %v253
      %v583 = vadd.s32 %v579, 1
      %v584 = vadd.s32 %v580, 1
      %v585 = vadd.s32 %v581, 1
      %v586 = vadd.s32 %v582, 1
      %v587 = vcvt.s32.f32 %v583
      %v588 = vcvt.s32.f32 %v584
      %v589 = vcvt.s32.f32 %v585
      %v590 = vcvt.s32.f32 %v586
      %592 = vset.pattern.permute.xlu0 0
      %593 = vperm.xlu0 %592, %v248
      %v594 = vpop.permute.xlu0 %593
      %v596 = vsub.f32 %v594, %v573
      %v597 = vsub.f32 %v594, %v574
      %v598 = vsub.f32 %v594, %v575
      %v599 = vsub.f32 %v594, %v576
      %v600 = vsub.f32 %v587, %v573
      %v601 = vsub.f32 %v588, %v574
      %v602 = vsub.f32 %v589, %v575
      %v603 = vsub.f32 %v590, %v576
      %v604 = vadd.f32 %v594, %v600
      %v605 = vadd.f32 %v594, %v601
      %v606 = vadd.f32 %v594, %v602
      %v607 = vadd.f32 %v594, %v603
      %v608 = vrcp.pop %v604
      %v609 = vmul.f32 %v596, %v608
      %v610 = vrcp.pop %v605
      %v611 = vmul.f32 %v597, %v610
      %v612 = vrcp.pop %v606
      %v613 = vmul.f32 %v598, %v612
      %v614 = vrcp.pop %v607
      %v615 = vmul.f32 %v599, %v614
      %v616 = vsub.f32 1.0, %v609
      %v617 = vsub.f32 1.0, %v611
      %v618 = vsub.f32 1.0, %v613
      %v619 = vsub.f32 1.0, %v615
      %620 = vrot.lane.b32.xlu0 %v616, 1
      %v621 = vpop.permute.xlu0 %620
      %622 = vrot.lane.b32.xlu0 %v617, 1
      %v623 = vpop.permute.xlu0 %622
      %624 = vrot.lane.b32.xlu0 %v618, 1
      %v625 = vpop.permute.xlu0 %624
      %626 = vrot.lane.b32.xlu0 %v619, 1
      %v627 = vpop.permute.xlu0 %626
      %v628 = vsel %vm272, %v625, %v627
      %v629 = vsel %vm272, %v623, %v625
      %v630 = vsel %vm272, %v621, %v623
      %v631 = vsel %vm272, %v627, %v621
      %vm632 = vcmp.eq.s32.totalorder %v250, 0
      %vm633 = vcmp.eq.s32.totalorder %v251, 0
      %vm634 = vcmp.eq.s32.totalorder %v252, 0
      %vm635 = vcmp.eq.s32.totalorder %v253, 0
      %v636 = vld [vmem:[#allocation3] sm:$0xf]
      %638 = vset.pattern.permute.xlu0 0
      %639 = vperm.xlu0 %638, %v636
      %v640 = vpop.permute.xlu0 %639
      %v642 = vsel %vm632, %v640, %v631
      %v643 = vsel %vm633, %v640, %v630
      %v644 = vsel %vm634, %v640, %v629
      %v645 = vsel %vm635, %v640, %v628
      %v646 = vld [vmem:[%s232] sm:$0xf]
      %v647 = vsub.f32 %v616, %v642
      %v648 = vsub.f32 %v617, %v643
      %v649 = vsub.f32 %v618, %v644
      %v650 = vsub.f32 %v619, %v645
      %v655 = vcombine.low %v647, %v648
      %v656 = vcombine.low %v649, %v650
      %v659 = vmul.f32 %v243, %v655
      %v660 = vmul.f32 %v244, %v656
      %v663 = vcombine.high %v659, %v659
      %v664 = vcombine.high %v660, %v660
      %vm667 = vcmask 1043456
      %v668 = vsel %vm667, %v659, 0.0
      %v669 = vsel %vm667, %v663, 0.0
      %v670 = vadd.f32 %v668, %v669
      %v671 = vsel %vm667, %v660, 0.0
      %v672 = vadd.f32 %v670, %v671
      %v673 = vsel %vm667, %v664, 0.0
      %v674 = vadd.f32 %v672, %v673
      %675 = vadd.xlane.f32.xlu0 %v674
      %v676 = vpop.xlane.xlu0 %675
      %v677 = vadd.f32 %v646, %v676
      %vm678 = vcmask 3072
      %679 = vst.msk [vmem:[%s232] sm:$0xf] %vm678, %v677
      %681 = vrot.lane.b32.xlu0 %v576, 1
      %v682 = vpop.permute.xlu0 %681
      %684 = vst.msk [vmem:[#allocation2] sm:$0xf] %vm678, %v682
      %686 = vrot.lane.b32.xlu0 %v619, 1
      %v687 = vpop.permute.xlu0 %686
      %689 = vst.msk [vmem:[#allocation3] sm:$0xf] %vm678, %v687
      %p690 = scmp.lt.s32.totalorder %s18, 1
      %s691 = scalar_select %p690, %s18, 1
      %s692 = smul.addr %s691, 4
      %s693 = scalar_lea.vmem %s3, %s692
      // Predicated region
      $region37: #{_lambda_.3} parent=31 // pred_check
        %p694 = pneg %p121
      $region38: #{_lambda_.3} parent=31 // pred_check_branch
        %696 = sbr.rel (%p694) target = $region40
      $region39: #{_lambda_.3} parent=31 // pred_region
        _
      $region40: #{_lambda_.3} parent=31 // pred_fallthru
        _
    $region32: #{_lambda_.3} parent=5 // pred_fallthru
      _
    %p697 = scmp.le.s32.totalorder 2, %s9
    // Predicated region
    $region41: #{_lambda_.3} parent=5 // pred_check
      %p698 = pneg %p697
    $region42: #{_lambda_.3} parent=5 // pred_check_branch
      %700 = sbr.rel (%p698) target = $region44
    $region43: #{_lambda_.3} parent=5 // pred_region
      %s701 = ssub.s32 %s9, 2
      // Predicated region
      $region45: #{_lambda_.3} parent=43 // pred_check
        %p702 = pneg %p127
      $region46: #{_lambda_.3} parent=43 // pred_check_branch
        %704 = sbr.rel (%p702) target = $region48
      $region47: #{_lambda_.3} parent=43 // pred_region
        %p705 = scmp.lt.s32.totalorder %s20, 1
        %s706 = scalar_select %p705, %s20, 1
        %s707 = smul.addr %s706, 4
        %s708 = scalar_lea.vmem %s3, %s707
      $region48: #{_lambda_.3} parent=43 // pred_fallthru
        _
    $region44: #{_lambda_.3} parent=5 // pred_fallthru
      _
  $region6: #{_lambda_.3} parent=0 // loop_footer
    %s13 = sadd.s32 1, %s9
  $region7: #{_lambda_.3} parent=0 // loop_footer_branch
    %8 = sbr.rel target = $region3
  $region8: #{_lambda_.3} parent=0 // loop_exit
    _

</llo_original>
